<compile_context>
chip_gen: v6e
topology: v6e:2x2x1
jax: 0.10.0
libtpu: 0.0.40
codegen_flags: <defaults>
</compile_context>

<pallas_src>
import jax
import jax.numpy as jnp
from jax.experimental import pallas as pl
from jax.experimental.pallas import tpu as pltpu


def discriminator_kernel(
    data_ref, cond_ref,        # (tile_b, in_size) f32, (tile_b, cond_size) f32
    w1_ref, b1_ref,            # data_layer:      Linear(in_size, 240)
    wc_ref, bc_ref,            # condition_layer: Linear(condition_size, 50)
    w2d_ref, w2c_ref, b2_ref,  # concat_layer Linear(290, 240) split 240/50
    w3_ref, b3_ref,            # concat_layer Linear(240, 1); b3 is SMEM scalar
    out_ref,                   # (1, tile_b) f32, lane-dense packed output
):
    # TODO(synk): training-mode Dropout(0.5) omitted (eval-mode identity);
    # could be added with pltpu.prng_seed + pltpu.stateful_bernoulli.

    # Cast inputs to bf16 in-kernel (VPU, essentially free) instead of in HBM.
    data_bf = data_ref[...].astype(jnp.bfloat16)
    cond_bf = cond_ref[...].astype(jnp.bfloat16)

    # data branch: Linear(in_size, 240) + ReLU  (bf16 MXU, f32 accumulate)
    d = jnp.dot(data_bf, w1_ref[...], preferred_element_type=jnp.float32)
    d = jnp.maximum(d + b1_ref[...], 0.0)

    # condition branch: Linear(condition_size, 50) + ReLU
    c = jnp.dot(cond_bf, wc_ref[...], preferred_element_type=jnp.float32)
    c = jnp.maximum(c + bc_ref[...], 0.0)

    # concat branch: Linear(290, 240) + ReLU, concat split into two matmuls
    h = (jnp.dot(d.astype(jnp.bfloat16), w2d_ref[...],
                 preferred_element_type=jnp.float32)
         + jnp.dot(c.astype(jnp.bfloat16), w2c_ref[...],
                   preferred_element_type=jnp.float32)
         + b2_ref[...])
    h = jnp.maximum(h, 0.0)

    # Linear(240, 1) + Sigmoid:  (1,240) @ h^T  ->  (1, tile_b)
    # Batch lands in the LANE dimension -> lane-dense, packed 4 B/row output.
    logits = jax.lax.dot_general(
        w3_ref[...], h,
        dimension_numbers=(((1,), (1,)), ((), ())),   # contract feature dims
        preferred_element_type=jnp.float32,
    ) + b3_ref[0, 0]
    out_ref[...] = jax.nn.sigmoid(logits)


def _round_up(x, m):
    return ((x + m - 1) // m) * m


def discriminator_forward(data, condition, params, *, tile_b=2048):
    """data: (B, in_size) f32, condition: (B, condition_size) f32 -> (B, 1) f32.

    tile_b: 2048 is safe on all generations (fits v5e's 16 MiB default scoped
    VMEM); use 4096 on v6e/v7x for better per-step-overhead amortization.
    """
    B, in_size = data.shape
    _, cond_size = condition.shape

    # Batch tile: multiple of 128 (lane-dense packed output; also a multiple of
    # 16 for bf16 sublane packing).  Clamp for small batches.
    tile_b = max(128, min(_round_up(tile_b, 128), _round_up(B, 128)))
    b_pad = _round_up(B, tile_b)
    grid = (b_pad // tile_b,)

    # Pad only the ragged remainder (no copy at all when B % tile_b == 0).
    if b_pad != B:
        data = jnp.pad(data, ((0, b_pad - B), (0, 0)))
        condition = jnp.pad(condition, ((0, b_pad - B), (0, 0)))

    def resident(arr):   # full array, VMEM-resident across all grid steps
        return pl.BlockSpec(arr.shape, lambda i: (0, 0))

    flops = 2 * b_pad * (in_size * 240 + cond_size * 50 + 290 * 240 + 240)
    bytes_accessed = (
        b_pad * (in_size + cond_size) * 4                       # f32 inputs
        + sum(int(v.size) * v.dtype.itemsize for v in params.values())
        + b_pad * 4                                             # packed output
    )

    out = pl.pallas_call(
        discriminator_kernel,
        out_shape=jax.ShapeDtypeStruct((1, b_pad), jnp.float32),
        grid=grid,
        in_specs=[
            pl.BlockSpec((tile_b, in_size), lambda i: (i, 0)),
            pl.BlockSpec((tile_b, cond_size), lambda i: (i, 0)),
            resident(params["w1"]), resident(params["b1"]),
            resident(params["wc"]), resident(params["bc"]),
            resident(params["w2d"]), resident(params["w2c"]),
            resident(params["b2"]),
            resident(params["w3"]),
            pl.BlockSpec(memory_space=pltpu.MemorySpace.SMEM),   # b3 scalar
        ],
        out_specs=pl.BlockSpec((1, tile_b), lambda i: (0, i)),
        compiler_params=pltpu.CompilerParams(
            dimension_semantics=("parallel",),
            vmem_limit_bytes=(32 * 1024 * 1024 if tile_b > 2048 else None)),
        cost_estimate=pl.CostEstimate(
            flops=flops, transcendentals=b_pad, bytes_accessed=bytes_accessed),
    )(
        data, condition,
        params["w1"], params["b1"],
        params["wc"], params["bc"],
        params["w2d"], params["w2c"], params["b2"],
        params["w3"], params["b3"],
    )
    # (1, b_pad) row-major == batch order; reshape is free, slice drops padding.
    return out.reshape(b_pad, 1)[:B]


def init_params(key, in_size, condition_size):
    """Deterministic PyTorch-like (uniform +/- 1/sqrt(fan_in)) init."""
    def linear(key, fan_in, fan_out):
        kw, kb = jax.random.split(key)
        bound = 1.0 / jnp.sqrt(jnp.float32(fan_in))
        w = jax.random.uniform(kw, (fan_in, fan_out), jnp.float32, -bound, bound)
        b = jax.random.uniform(kb, (1, fan_out), jnp.float32, -bound, bound)
        return w, b

    k1, k2, k3, k4 = jax.random.split(key, 4)
    w1, b1 = linear(k1, in_size, 240)          # data_layer
    wc, bc = linear(k2, condition_size, 50)    # condition_layer
    w2, b2 = linear(k3, 290, 240)              # concat_layer Linear(290, 240)
    w3, b3 = linear(k4, 240, 1)                # concat_layer Linear(240, 1)
    return {
        # MXU weights in bf16 (f32 accumulation inside the kernel)
        "w1": w1.astype(jnp.bfloat16), "b1": b1,
        "wc": wc.astype(jnp.bfloat16), "bc": bc,
        # split 290-row weight: first 240 rows = data branch, last 50 = condition
        "w2d": w2[:240, :].astype(jnp.bfloat16),
        "w2c": w2[240:, :].astype(jnp.bfloat16),
        "b2": b2,
        # final layer stays f32: (1, 240) row used as the LHS of an A @ B^T matmul
        "w3": w3.reshape(1, 240),
        "b3": b3.reshape(1, 1),                # SMEM scalar
    }


if __name__ == "__main__":
    key = jax.random.PRNGKey(0)
    k_data, k_cond, k_params = jax.random.split(key, 3)

    B = 8
    in_size = 64
    condition_size = 16

    data = jax.random.normal(k_data, (B, in_size), jnp.float32)
    condition = jax.random.normal(k_cond, (B, condition_size), jnp.float32)
    params = init_params(k_params, in_size, condition_size)

    out = discriminator_forward(data, condition, params)
    out = jax.block_until_ready(out)

    assert out.shape == (B, 1)
    assert bool(jnp.all((out >= 0.0) & (out <= 1.0)))
    print("KERNEL_OK")
</pallas_src>

<mosaic_0001>
module attributes {stable_mosaic.version = 11 : i64} {
  func.func @discriminator_kernel(%arg0: i32, %arg1: memref<128x64xf32, #tpu.memory_space<vmem>>, %arg2: memref<128x16xf32, #tpu.memory_space<vmem>>, %arg3: memref<64x240xbf16, #tpu.memory_space<vmem>>, %arg4: memref<1x240xf32, #tpu.memory_space<vmem>>, %arg5: memref<16x50xbf16, #tpu.memory_space<vmem>>, %arg6: memref<1x50xf32, #tpu.memory_space<vmem>>, %arg7: memref<240x240xbf16, #tpu.memory_space<vmem>>, %arg8: memref<50x240xbf16, #tpu.memory_space<vmem>>, %arg9: memref<1x240xf32, #tpu.memory_space<vmem>>, %arg10: memref<1x240xf32, #tpu.memory_space<vmem>>, %arg11: memref<1x1xf32, #tpu.memory_space<smem>>, %arg12: memref<1x128xf32, #tpu.memory_space<vmem>>) attributes {dimension_semantics = [#tpu.dimension_semantics<parallel>], iteration_bounds = array<i64: 1>, scalar_prefetch = 0 : i64, scratch_operands = 0 : i64, tpu.core_type = #tpu.core_type<tc>, window_params = [{transform_indices = @transform_0, window_bounds = array<i64: 128, 64>}, {transform_indices = @transform_1, window_bounds = array<i64: 128, 16>}, {pipeline_mode = #tpu.pipeline_mode<synchronous>, transform_indices = @transform_2, window_bounds = array<i64: 64, 240>}, {pipeline_mode = #tpu.pipeline_mode<synchronous>, transform_indices = @transform_3, window_bounds = array<i64: 1, 240>}, {pipeline_mode = #tpu.pipeline_mode<synchronous>, transform_indices = @transform_4, window_bounds = array<i64: 16, 50>}, {pipeline_mode = #tpu.pipeline_mode<synchronous>, transform_indices = @transform_5, window_bounds = array<i64: 1, 50>}, {pipeline_mode = #tpu.pipeline_mode<synchronous>, transform_indices = @transform_6, window_bounds = array<i64: 240, 240>}, {pipeline_mode = #tpu.pipeline_mode<synchronous>, transform_indices = @transform_7, window_bounds = array<i64: 50, 240>}, {pipeline_mode = #tpu.pipeline_mode<synchronous>, transform_indices = @transform_8, window_bounds = array<i64: 1, 240>}, {pipeline_mode = #tpu.pipeline_mode<synchronous>, transform_indices = @transform_9, window_bounds = array<i64: 1, 240>}, {transform_indices = @transform_10, window_bounds = array<i64: 1, 1>}, {transform_indices = @transform_11, window_bounds = array<i64: 1, 128>}]} {
    %c0 = arith.constant 0 : index
    %c0_0 = arith.constant 0 : index
    %0 = vector.load %arg1[%c0, %c0_0] : memref<128x64xf32, #tpu.memory_space<vmem>>, vector<128x64xf32>
    %1 = arith.truncf %0 : vector<128x64xf32> to vector<128x64xbf16>
    %c0_1 = arith.constant 0 : index
    %c0_2 = arith.constant 0 : index
    %2 = vector.load %arg2[%c0_1, %c0_2] : memref<128x16xf32, #tpu.memory_space<vmem>>, vector<128x16xf32>
    %3 = arith.truncf %2 : vector<128x16xf32> to vector<128x16xbf16>
    %c0_3 = arith.constant 0 : index
    %c0_4 = arith.constant 0 : index
    %4 = vector.load %arg3[%c0_3, %c0_4] : memref<64x240xbf16, #tpu.memory_space<vmem>>, vector<64x240xbf16>
    %cst = arith.constant dense<0.000000e+00> : vector<128x240xf32>
    %5 = tpu.matmul %1, %4, %cst {dimension_numbers = #tpu.dot_dimension_numbers<[1], [0], [0], [1], [0, 0, 1, 1], [], []>} : vector<128x64xbf16>, vector<64x240xbf16>, vector<128x240xf32> -> vector<128x240xf32>
    %c0_5 = arith.constant 0 : index
    %c0_6 = arith.constant 0 : index
    %6 = vector.load %arg4[%c0_5, %c0_6] : memref<1x240xf32, #tpu.memory_space<vmem>>, vector<1x240xf32>
    %7 = vector.broadcast %6 : vector<1x240xf32> to vector<128x240xf32>
    %8 = arith.addf %5, %7 : vector<128x240xf32>
    %cst_7 = arith.constant 0.000000e+00 : f32
    %9 = vector.broadcast %cst_7 : f32 to vector<128x240xf32>
    %10 = arith.maximumf %8, %9 : vector<128x240xf32>
    %c0_8 = arith.constant 0 : index
    %c0_9 = arith.constant 0 : index
    %11 = vector.load %arg5[%c0_8, %c0_9] : memref<16x50xbf16, #tpu.memory_space<vmem>>, vector<16x50xbf16>
    %cst_10 = arith.constant dense<0.000000e+00> : vector<128x50xf32>
    %12 = tpu.matmul %3, %11, %cst_10 {dimension_numbers = #tpu.dot_dimension_numbers<[1], [0], [0], [1], [0, 0, 1, 1], [], []>} : vector<128x16xbf16>, vector<16x50xbf16>, vector<128x50xf32> -> vector<128x50xf32>
    %c0_11 = arith.constant 0 : index
    %c0_12 = arith.constant 0 : index
    %13 = vector.load %arg6[%c0_11, %c0_12] : memref<1x50xf32, #tpu.memory_space<vmem>>, vector<1x50xf32>
    %14 = vector.broadcast %13 : vector<1x50xf32> to vector<128x50xf32>
    %15 = arith.addf %12, %14 : vector<128x50xf32>
    %cst_13 = arith.constant 0.000000e+00 : f32
    %16 = vector.broadcast %cst_13 : f32 to vector<128x50xf32>
    %17 = arith.maximumf %15, %16 : vector<128x50xf32>
    %18 = arith.truncf %10 : vector<128x240xf32> to vector<128x240xbf16>
    %c0_14 = arith.constant 0 : index
    %c0_15 = arith.constant 0 : index
    %19 = vector.load %arg7[%c0_14, %c0_15] : memref<240x240xbf16, #tpu.memory_space<vmem>>, vector<240x240xbf16>
    %cst_16 = arith.constant dense<0.000000e+00> : vector<128x240xf32>
    %20 = tpu.matmul %18, %19, %cst_16 {dimension_numbers = #tpu.dot_dimension_numbers<[1], [0], [0], [1], [0, 0, 1, 1], [], []>} : vector<128x240xbf16>, vector<240x240xbf16>, vector<128x240xf32> -> vector<128x240xf32>
    %21 = arith.truncf %17 : vector<128x50xf32> to vector<128x50xbf16>
    %c0_17 = arith.constant 0 : index
    %c0_18 = arith.constant 0 : index
    %22 = vector.load %arg8[%c0_17, %c0_18] : memref<50x240xbf16, #tpu.memory_space<vmem>>, vector<50x240xbf16>
    %cst_19 = arith.constant dense<0.000000e+00> : vector<128x240xf32>
    %23 = tpu.matmul %21, %22, %cst_19 {dimension_numbers = #tpu.dot_dimension_numbers<[1], [0], [0], [1], [0, 0, 1, 1], [], []>} : vector<128x50xbf16>, vector<50x240xbf16>, vector<128x240xf32> -> vector<128x240xf32>
    %24 = arith.addf %20, %23 : vector<128x240xf32>
    %c0_20 = arith.constant 0 : index
    %c0_21 = arith.constant 0 : index
    %25 = vector.load %arg9[%c0_20, %c0_21] : memref<1x240xf32, #tpu.memory_space<vmem>>, vector<1x240xf32>
    %26 = vector.broadcast %25 : vector<1x240xf32> to vector<128x240xf32>
    %27 = arith.addf %24, %26 : vector<128x240xf32>
    %cst_22 = arith.constant 0.000000e+00 : f32
    %28 = vector.broadcast %cst_22 : f32 to vector<128x240xf32>
    %29 = arith.maximumf %27, %28 : vector<128x240xf32>
    %c0_23 = arith.constant 0 : index
    %c0_24 = arith.constant 0 : index
    %30 = vector.load %arg10[%c0_23, %c0_24] : memref<1x240xf32, #tpu.memory_space<vmem>>, vector<1x240xf32>
    %cst_25 = arith.constant dense<0.000000e+00> : vector<1x128xf32>
    %31 = tpu.matmul %30, %29, %cst_25 {dimension_numbers = #tpu.dot_dimension_numbers<[1], [1], [0], [0], [0, 0, 1, 0], [], []>} : vector<1x240xf32>, vector<128x240xf32>, vector<1x128xf32> -> vector<1x128xf32>
    %c0_26 = arith.constant 0 : index
    %c0_27 = arith.constant 0 : index
    %32 = memref.load %arg11[%c0_26, %c0_27] : memref<1x1xf32, #tpu.memory_space<smem>>
    %33 = vector.broadcast %32 : f32 to vector<1x128xf32>
    %34 = arith.addf %31, %33 : vector<1x128xf32>
    %35 = arith.negf %34 : vector<1x128xf32>
    %36 = math.exp %35 : vector<1x128xf32>
    %cst_28 = arith.constant 1.000000e+00 : f32
    %37 = vector.broadcast %cst_28 : f32 to vector<1x128xf32>
    %38 = arith.addf %37, %36 : vector<1x128xf32>
    %39 = arith.divf %37, %38 : vector<1x128xf32>
    %c0_29 = arith.constant 0 : index
    %c0_30 = arith.constant 0 : index
    %40 = vector.load %arg12[%c0_29, %c0_30] : memref<1x128xf32, #tpu.memory_space<vmem>>, vector<1x128xf32>
    tpu.vector_store %arg12[%c0_29, %c0_30], %39 {strides = array<i32>} : memref<1x128xf32, #tpu.memory_space<vmem>>, vector<1x128xf32>,
    return
  }
  func.func @transform_0(%arg0: i32) -> (i32, i32) {
    %c0_i32 = arith.constant 0 : i32
    %c0_i32_0 = arith.constant 0 : i32
    return %arg0, %c0_i32 : i32, i32
  }
  func.func @transform_1(%arg0: i32) -> (i32, i32) {
    %c0_i32 = arith.constant 0 : i32
    %c0_i32_0 = arith.constant 0 : i32
    return %arg0, %c0_i32 : i32, i32
  }
  func.func @transform_2(%arg0: i32) -> (i32, i32) {
    %c0_i32 = arith.constant 0 : i32
    %c0_i32_0 = arith.constant 0 : i32
    %c0_i32_1 = arith.constant 0 : i32
    return %c0_i32, %c0_i32_0 : i32, i32
  }
  func.func @transform_3(%arg0: i32) -> (i32, i32) {
    %c0_i32 = arith.constant 0 : i32
    %c0_i32_0 = arith.constant 0 : i32
    %c0_i32_1 = arith.constant 0 : i32
    return %c0_i32, %c0_i32_0 : i32, i32
  }
  func.func @transform_4(%arg0: i32) -> (i32, i32) {
    %c0_i32 = arith.constant 0 : i32
    %c0_i32_0 = arith.constant 0 : i32
    %c0_i32_1 = arith.constant 0 : i32
    return %c0_i32, %c0_i32_0 : i32, i32
  }
  func.func @transform_5(%arg0: i32) -> (i32, i32) {
    %c0_i32 = arith.constant 0 : i32
    %c0_i32_0 = arith.constant 0 : i32
    %c0_i32_1 = arith.constant 0 : i32
    return %c0_i32, %c0_i32_0 : i32, i32
  }
  func.func @transform_6(%arg0: i32) -> (i32, i32) {
    %c0_i32 = arith.constant 0 : i32
    %c0_i32_0 = arith.constant 0 : i32
    %c0_i32_1 = arith.constant 0 : i32
    return %c0_i32, %c0_i32_0 : i32, i32
  }
  func.func @transform_7(%arg0: i32) -> (i32, i32) {
    %c0_i32 = arith.constant 0 : i32
    %c0_i32_0 = arith.constant 0 : i32
    %c0_i32_1 = arith.constant 0 : i32
    return %c0_i32, %c0_i32_0 : i32, i32
  }
  func.func @transform_8(%arg0: i32) -> (i32, i32) {
    %c0_i32 = arith.constant 0 : i32
    %c0_i32_0 = arith.constant 0 : i32
    %c0_i32_1 = arith.constant 0 : i32
    return %c0_i32, %c0_i32_0 : i32, i32
  }
  func.func @transform_9(%arg0: i32) -> (i32, i32) {
    %c0_i32 = arith.constant 0 : i32
    %c0_i32_0 = arith.constant 0 : i32
    %c0_i32_1 = arith.constant 0 : i32
    return %c0_i32, %c0_i32_0 : i32, i32
  }
  func.func @transform_10(%arg0: i32) -> (i32, i32) {
    %c0_i32 = arith.constant 0 : i32
    %c0_i32_0 = arith.constant 0 : i32
    %c0_i32_1 = arith.constant 0 : i32
    return %c0_i32, %c0_i32_0 : i32, i32
  }
  func.func @transform_11(%arg0: i32) -> (i32, i32) {
    %c0_i32 = arith.constant 0 : i32
    %c0_i32_0 = arith.constant 0 : i32
    return %c0_i32, %arg0 : i32, i32
  }
}

</mosaic_0001>

<llo_original>
// kernel: tpu_custom_call.1
$region0: #{tpu_custom_call.1}
  #allocation0 [shape = 'u32[]', space=smem, size = 0x4, offset = 0x4, fixed_abs, tag = 'smem constant byte address 0x4 - core index']
  #allocation1 [shape = 'u32[144,128]{1,0:T(1,128)}', space=vmem, size = 0x12000, scoped, tag = 'internal scratch']
  #allocation2 [shape = 'f32[1,1]{1,0:T(1,128)S(6)}', space=smem, size = 0x200, scoped, tag = 'scoped memory for tpu_custom_call.1']
  %s0 = inlined_call_operand.vmem [shape: f32[128,64], index: 0, kind: input, shape index: {}]
  %s1 = inlined_call_operand.vmem [shape: f32[128,16], index: 1, kind: input, shape index: {}]
  %s2 = inlined_call_operand.vmem [shape: bf16[64,240], index: 2, kind: input, shape index: {}]
  %s3 = inlined_call_operand.vmem [shape: f32[1,240], index: 3, kind: input, shape index: {}]
  %s4 = inlined_call_operand.vmem [shape: bf16[16,50], index: 4, kind: input, shape index: {}]
  %s5 = inlined_call_operand.vmem [shape: f32[1,50], index: 5, kind: input, shape index: {}]
  %s6 = inlined_call_operand.vmem [shape: bf16[240,240], index: 6, kind: input, shape index: {}]
  %s7 = inlined_call_operand.hbm [shape: bf16[50,240], index: 7, kind: input, shape index: {}]
  %s8 = inlined_call_operand.vmem [shape: f32[1,240], index: 8, kind: input, shape index: {}]
  %s9 = inlined_call_operand.vmem [shape: f32[1,240], index: 9, kind: input, shape index: {}]
  %s10 = inlined_call_operand.<no memory space> [shape: f32[1,1], index: 10, kind: input, shape index: {}]
  %s11 = inlined_call_operand.hbm [shape: f32[1,128], index: 11, kind: output, shape index: {}]
  %s12 = sld [smem:[#allocation0]]
  $region58: #{tpu_custom_call.1} parent=0
    _
  %s14 = ssub.s32 1, %s12
  %s15 = scalar_select 0, %s14, %s12
  %16 = sst [smem:[#allocation2]] %s10
  $region1: #{tpu_custom_call.1} parent=0
    #allocation3 [shape = 'u8[28672]{0}', space=vmem, size = 0x7000, scoped, tag = 'input window, operand 7, single buffered']
    #allocation4 [shape = 's32[1]{0}', space=sflag, size = 0x4, scoped, tag = 'scoped memory for tpu_custom_call.1']
    #allocation5 [shape = 's32[1]{0}', space=sflag, size = 0x4, scoped, tag = 'scoped memory for tpu_custom_call.1']
    #allocation6 [shape = 'u8[512]{0}', space=vmem, size = 0x400, scoped, tag = 'output window, operand 0, single buffered']
    %17 = vsyncpa [#allocation4], 0
    %18 = vsyncpa [#allocation5], 0
    // Predicated region
    $region2: #{tpu_custom_call.1} parent=1 // pred_check
      _
    $region3: #{tpu_custom_call.1} parent=1 // pred_check_branch
      %20 = sbr.rel (0) target = $region5
    $region4: #{tpu_custom_call.1} parent=1 // pred_region
      _
    $region5: #{tpu_custom_call.1} parent=1 // pred_fallthru
      _
    // Predicated region
    $region6: #{tpu_custom_call.1} parent=1 // pred_check
      _
    $region7: #{tpu_custom_call.1} parent=1 // pred_check_branch
      %22 = sbr.rel (0) target = $region9
    $region8: #{tpu_custom_call.1} parent=1 // pred_region
      _
    $region9: #{tpu_custom_call.1} parent=1 // pred_fallthru
      _
    // Predicated region
    $region10: #{tpu_custom_call.1} parent=1 // pred_check
      _
    $region11: #{tpu_custom_call.1} parent=1 // pred_check_branch
      %24 = sbr.rel (0) target = $region13
    $region12: #{tpu_custom_call.1} parent=1 // pred_region
      _
    $region13: #{tpu_custom_call.1} parent=1 // pred_fallthru
      _
    // Predicated region
    $region14: #{tpu_custom_call.1} parent=1 // pred_check
      _
    $region15: #{tpu_custom_call.1} parent=1 // pred_check_branch
      %26 = sbr.rel (0) target = $region17
    $region16: #{tpu_custom_call.1} parent=1 // pred_region
      _
    $region17: #{tpu_custom_call.1} parent=1 // pred_fallthru
      _
    // Predicated region
    $region18: #{tpu_custom_call.1} parent=1 // pred_check
      _
    $region19: #{tpu_custom_call.1} parent=1 // pred_check_branch
      %28 = sbr.rel (0) target = $region21
    $region20: #{tpu_custom_call.1} parent=1 // pred_region
      _
    $region21: #{tpu_custom_call.1} parent=1 // pred_fallthru
      _
    // Predicated region
    $region22: #{tpu_custom_call.1} parent=1 // pred_check
      _
    $region23: #{tpu_custom_call.1} parent=1 // pred_check_branch
      %30 = sbr.rel (0) target = $region25
    $region24: #{tpu_custom_call.1} parent=1 // pred_region
      _
    $region25: #{tpu_custom_call.1} parent=1 // pred_fallthru
      _
    // Predicated region
    $region26: #{tpu_custom_call.1} parent=1 // pred_check
      _
    $region27: #{tpu_custom_call.1} parent=1 // pred_check_branch
      %32 = sbr.rel (0) target = $region29
    $region28: #{tpu_custom_call.1} parent=1 // pred_region
      _
    $region29: #{tpu_custom_call.1} parent=1 // pred_fallthru
      _
    // Predicated region
    $region30: #{tpu_custom_call.1} parent=1 // pred_check
      _
    $region31: #{tpu_custom_call.1} parent=1 // pred_check_branch
      %34 = sbr.rel (0) target = $region33
    $region32: #{tpu_custom_call.1} parent=1 // pred_region
      %s36 = ssub.s32 896, 896
      %37 = vsyncadd [#allocation4], %s36
      %s38 = sshll.u32 [#allocation3], 4
      %s39 = int_to_ptr.vmem [resolvable:$true] %s38
      %44 = dma.hbm_to_vmem [thread:$0]  %s7, 896, %s39, [#allocation4], 128, 128, 8
    $region33: #{tpu_custom_call.1} parent=1 // pred_fallthru
      _
    // Predicated region
    $region34: #{tpu_custom_call.1} parent=1 // pred_check
      _
    $region35: #{tpu_custom_call.1} parent=1 // pred_check_branch
      %46 = sbr.rel (0) target = $region37
    $region36: #{tpu_custom_call.1} parent=1 // pred_region
      _
    $region37: #{tpu_custom_call.1} parent=1 // pred_fallthru
      _
    // Predicated region
    $region38: #{tpu_custom_call.1} parent=1 // pred_check
      _
    $region39: #{tpu_custom_call.1} parent=1 // pred_check_branch
      %48 = sbr.rel (0) target = $region41
    $region40: #{tpu_custom_call.1} parent=1 // pred_region
      _
    $region41: #{tpu_custom_call.1} parent=1 // pred_fallthru
      _
    // Predicated region
    $region42: #{tpu_custom_call.1} parent=1 // pred_check
      _
    $region43: #{tpu_custom_call.1} parent=1 // pred_check_branch
      %50 = sbr.rel (0) target = $region45
    $region44: #{tpu_custom_call.1} parent=1 // pred_region
      _
    $region45: #{tpu_custom_call.1} parent=1 // pred_fallthru
      _
    // Predicated region
    $region46: #{tpu_custom_call.1} parent=1 // pred_check
      _
    $region47: #{tpu_custom_call.1} parent=1 // pred_check_branch
      %52 = sbr.rel (0) target = $region49
    $region48: #{tpu_custom_call.1} parent=1 // pred_region
      %53 = dma.done [#allocation4], 896
    $region49: #{tpu_custom_call.1} parent=1 // pred_fallthru
      _
    %v55 = vld [vmem:[%s0] sm:$0xff]
    %v56 = vld [vmem:[%s0 + $0x8] sm:$0xff]
    %v57 = vld [vmem:[%s0 + $0x10] sm:$0xff]
    %v58 = vld [vmem:[%s0 + $0x18] sm:$0xff]
    %v59 = vld [vmem:[%s0 + $0x20] sm:$0xff]
    %v60 = vld [vmem:[%s0 + $0x28] sm:$0xff]
    %v61 = vld [vmem:[%s0 + $0x30] sm:$0xff]
    %v62 = vld [vmem:[%s0 + $0x38] sm:$0xff]
    %v63 = vld [vmem:[%s0 + $0x40] sm:$0xff]
    %v64 = vld [vmem:[%s0 + $0x48] sm:$0xff]
    %v65 = vld [vmem:[%s0 + $0x50] sm:$0xff]
    %v66 = vld [vmem:[%s0 + $0x58] sm:$0xff]
    %v67 = vld [vmem:[%s0 + $0x60] sm:$0xff]
    %v68 = vld [vmem:[%s0 + $0x68] sm:$0xff]
    %v69 = vld [vmem:[%s0 + $0x70] sm:$0xff]
    %v70 = vld [vmem:[%s0 + $0x78] sm:$0xff]
    %v71 = vpack.c.bf16 %v56, %v55
    %v72 = vpack.c.bf16 %v58, %v57
    %v73 = vpack.c.bf16 %v60, %v59
    %v74 = vpack.c.bf16 %v62, %v61
    %v75 = vpack.c.bf16 %v64, %v63
    %v76 = vpack.c.bf16 %v66, %v65
    %v77 = vpack.c.bf16 %v68, %v67
    %v78 = vpack.c.bf16 %v70, %v69
    %v79 = vld [vmem:[%s1] sm:$0xff]
    %v80 = vld [vmem:[%s1 + $0x8] sm:$0xff]
    %v81 = vld [vmem:[%s1 + $0x10] sm:$0xff]
    %v82 = vld [vmem:[%s1 + $0x18] sm:$0xff]
    %v83 = vld [vmem:[%s1 + $0x20] sm:$0xff]
    %v84 = vld [vmem:[%s1 + $0x28] sm:$0xff]
    %v85 = vld [vmem:[%s1 + $0x30] sm:$0xff]
    %v86 = vld [vmem:[%s1 + $0x38] sm:$0xff]
    %v87 = vld [vmem:[%s1 + $0x40] sm:$0xff]
    %v88 = vld [vmem:[%s1 + $0x48] sm:$0xff]
    %v89 = vld [vmem:[%s1 + $0x50] sm:$0xff]
    %v90 = vld [vmem:[%s1 + $0x58] sm:$0xff]
    %v91 = vld [vmem:[%s1 + $0x60] sm:$0xff]
    %v92 = vld [vmem:[%s1 + $0x68] sm:$0xff]
    %v93 = vld [vmem:[%s1 + $0x70] sm:$0xff]
    %v94 = vld [vmem:[%s1 + $0x78] sm:$0xff]
    %v95 = vpack.c.bf16 %v80, %v79
    %v96 = vpack.c.bf16 %v82, %v81
    %v97 = vpack.c.bf16 %v84, %v83
    %v98 = vpack.c.bf16 %v86, %v85
    %v99 = vpack.c.bf16 %v88, %v87
    %v100 = vpack.c.bf16 %v90, %v89
    %v101 = vpack.c.bf16 %v92, %v91
    %v102 = vpack.c.bf16 %v94, %v93
    %v103 = vld [vmem:[%s2] sm:$0xff]
    %v104 = vld [vmem:[%s2 + $0x8] sm:$0xff]
    %v105 = vld [vmem:[%s2 + $0x10] sm:$0xff]
    %v106 = vld [vmem:[%s2 + $0x18] sm:$0xff]
    %v107 = vld [vmem:[%s2 + $0x20] sm:$0xff]
    %v108 = vld [vmem:[%s2 + $0x28] sm:$0xff]
    %v109 = vld [vmem:[%s2 + $0x30] sm:$0xff]
    %v110 = vld [vmem:[%s2 + $0x38] sm:$0xff]
    %v111 = vld [vmem:[%s3] sm:$0x3]
    %v113 = vlaneseq
    %v114 = vshrl.u32 %v113, 7
    %v115 = vsub.s32 0, %v114
    %v116 = vrot.slane %v111, %v115
    %v117 = vlaneseq
    %v118 = vshrl.u32 %v117, 7
    %v119 = vsub.s32 1, %v118
    %v120 = vrot.slane %v111, %v119
    %v131 = vunpack.c.l.b16 %v103
    %v132 = vunpack.c.h.b16 %v103
    %v133 = vunpack.c.l.b16 %v104
    %v134 = vunpack.c.h.b16 %v104
    %v135 = vunpack.c.l.b16 %v105
    %v136 = vunpack.c.h.b16 %v105
    %v137 = vunpack.c.l.b16 %v106
    %v138 = vunpack.c.h.b16 %v106
    %v139 = vunpack.c.l.b16 %v107
    %v140 = vunpack.c.h.b16 %v107
    %v141 = vunpack.c.l.b16 %v108
    %v142 = vunpack.c.h.b16 %v108
    %v143 = vunpack.c.l.b16 %v109
    %v144 = vunpack.c.h.b16 %v109
    %v145 = vunpack.c.l.b16 %v110
    %v146 = vunpack.c.h.b16 %v110
    %v147 = vpack.c.b16 %v133, %v131
    %v148 = vpack.c.b16 %v134, %v132
    %v149 = vpack.c.b16 %v137, %v135
    %v150 = vpack.c.b16 %v138, %v136
    %v151 = vpack.c.b16 %v141, %v139
    %v152 = vpack.c.b16 %v142, %v140
    %v153 = vpack.c.b16 %v145, %v143
    %v154 = vpack.c.b16 %v146, %v144
    %vm163 = vcmask 523264
    %v165 = vsel %vm163, %v71, 0
    %v168 = vsel %vm163, %v72, 0
    %v171 = vsel %vm163, %v73, 0
    %v174 = vsel %vm163, %v74, 0
    %v177 = vsel %vm163, %v75, 0
    %v180 = vsel %vm163, %v76, 0
    %v183 = vsel %vm163, %v77, 0
    %v186 = vsel %vm163, %v78, 0
    %188 = vmatprep.subr.bf16.mxu0 0
    %189 = vmatpush1.bf16.msra.mxu0 0
    %190 = vmatprep.subr.bf16.mxu0 0
    %191 = vmatpush1.bf16.msra.mxu0 0
    %192 = vmatprep.subr.bf16.mxu0 0
    %193 = vmatpush1.bf16.msra.mxu0 0
    %194 = vmatprep.subr.bf16.mxu0 0
    %195 = vmatpush1.bf16.msra.mxu0 0
    %196 = vmatprep.subr.bf16.mxu0 %v154
    %197 = vmatpush1.bf16.msra.mxu0 %v153
    %198 = vmatprep.subr.bf16.mxu0 %v152
    %199 = vmatpush1.bf16.msra.mxu0 %v151
    %200 = vmatprep.subr.bf16.mxu0 %v150
    %201 = vmatpush1.bf16.msra.mxu0 %v149
    %202 = vmatprep.subr.bf16.mxu0 %v148
    %203 = vmatpush1.bf16.msra.mxu0 %v147
    %204 = vmatprep.subr.bf16.mxu0 0
    %205 = vmatpush2.bf16.msra.mxu0 0
    %206 = vmatprep.subr.bf16.mxu0 0
    %207 = vmatpush2.bf16.msra.mxu0 0
    %208 = vmatprep.subr.bf16.mxu0 0
    %209 = vmatpush2.bf16.msra.mxu0 0
    %210 = vmatprep.subr.bf16.mxu0 0
    %211 = vmatpush2.bf16.msra.mxu0 0
    %212 = vmatprep.subr.bf16.mxu0 0
    %213 = vmatpush2.bf16.msra.mxu0 0
    %214 = vmatprep.subr.bf16.mxu0 0
    %215 = vmatpush2.bf16.msra.mxu0 0
    %216 = vmatprep.subr.bf16.mxu0 0
    %217 = vmatpush2.bf16.msra.mxu0 0
    %218 = vmatprep.subr.bf16.mxu0 0
    %219 = vmatpush2.bf16.msra.mxu0 0
    %220 = vmatprep.mubr.bf16.mxu0 0
    %221 = vmatmul.mubr.bf16.gmra.mxu0 %v165
    %v222 = vpop.f32.mrf.mxu0
    %v223 = vadd.f32 %v116, %v222
    %v224 = vpop.f32.mrf.mxu0
    %v225 = vadd.f32 %v120, %v224
    %v226 = vpop.f32.mrf.mxu0
    %v227 = vadd.f32 %v116, %v226
    %v228 = vpop.f32.mrf.mxu0
    %v229 = vadd.f32 %v120, %v228
    %230 = vmatprep.mubr.bf16.mxu0 0
    %231 = vmatmul.mubr.bf16.gmra.mxu0 %v168
    %v232 = vpop.f32.mrf.mxu0
    %v233 = vadd.f32 %v116, %v232
    %v234 = vpop.f32.mrf.mxu0
    %v235 = vadd.f32 %v120, %v234
    %v236 = vpop.f32.mrf.mxu0
    %v237 = vadd.f32 %v116, %v236
    %v238 = vpop.f32.mrf.mxu0
    %v239 = vadd.f32 %v120, %v238
    %240 = vmatprep.mubr.bf16.mxu0 0
    %241 = vmatmul.mubr.bf16.gmra.mxu0 %v171
    %v242 = vpop.f32.mrf.mxu0
    %v243 = vadd.f32 %v116, %v242
    %v244 = vpop.f32.mrf.mxu0
    %v245 = vadd.f32 %v120, %v244
    %v246 = vpop.f32.mrf.mxu0
    %v247 = vadd.f32 %v116, %v246
    %v248 = vpop.f32.mrf.mxu0
    %v249 = vadd.f32 %v120, %v248
    %250 = vmatprep.mubr.bf16.mxu0 0
    %251 = vmatmul.mubr.bf16.gmra.mxu0 %v174
    %v252 = vpop.f32.mrf.mxu0
    %v253 = vadd.f32 %v116, %v252
    %v254 = vpop.f32.mrf.mxu0
    %v255 = vadd.f32 %v120, %v254
    %v256 = vpop.f32.mrf.mxu0
    %v257 = vadd.f32 %v116, %v256
    %v258 = vpop.f32.mrf.mxu0
    %v259 = vadd.f32 %v120, %v258
    %260 = vmatprep.mubr.bf16.mxu0 0
    %261 = vmatmul.mubr.bf16.gmra.mxu0 %v177
    %v262 = vpop.f32.mrf.mxu0
    %v263 = vadd.f32 %v116, %v262
    %v264 = vpop.f32.mrf.mxu0
    %v265 = vadd.f32 %v120, %v264
    %v266 = vpop.f32.mrf.mxu0
    %v267 = vadd.f32 %v116, %v266
    %v268 = vpop.f32.mrf.mxu0
    %v269 = vadd.f32 %v120, %v268
    %270 = vmatprep.mubr.bf16.mxu0 0
    %271 = vmatmul.mubr.bf16.gmra.mxu0 %v180
    %v272 = vpop.f32.mrf.mxu0
    %v273 = vadd.f32 %v116, %v272
    %v274 = vpop.f32.mrf.mxu0
    %v275 = vadd.f32 %v120, %v274
    %v276 = vpop.f32.mrf.mxu0
    %v277 = vadd.f32 %v116, %v276
    %v278 = vpop.f32.mrf.mxu0
    %v279 = vadd.f32 %v120, %v278
    %280 = vmatprep.mubr.bf16.mxu0 0
    %281 = vmatmul.mubr.bf16.gmra.mxu0 %v183
    %v282 = vpop.f32.mrf.mxu0
    %v283 = vadd.f32 %v116, %v282
    %v284 = vpop.f32.mrf.mxu0
    %v285 = vadd.f32 %v120, %v284
    %v286 = vpop.f32.mrf.mxu0
    %v287 = vadd.f32 %v116, %v286
    %v288 = vpop.f32.mrf.mxu0
    %v289 = vadd.f32 %v120, %v288
    %290 = vmatprep.mubr.bf16.mxu0 0
    %291 = vmatmul.mubr.bf16.gmra.mxu0 %v186
    %v292 = vpop.f32.mrf.mxu0
    %v293 = vadd.f32 %v116, %v292
    %v294 = vpop.f32.mrf.mxu0
    %v295 = vadd.f32 %v120, %v294
    %v296 = vpop.f32.mrf.mxu0
    %v297 = vadd.f32 %v116, %v296
    %v298 = vpop.f32.mrf.mxu0
    %v299 = vadd.f32 %v120, %v298
    %300 = vdwg.mxu0
    %v301 = vmax.f32 %v223, 0.0
    %v302 = vmax.f32 %v225, 0.0
    %v303 = vmax.f32 %v227, 0.0
    %v304 = vmax.f32 %v229, 0.0
    %v305 = vmax.f32 %v233, 0.0
    %v306 = vmax.f32 %v235, 0.0
    %v307 = vmax.f32 %v237, 0.0
    %v308 = vmax.f32 %v239, 0.0
    %v309 = vmax.f32 %v243, 0.0
    %v310 = vmax.f32 %v245, 0.0
    %v311 = vmax.f32 %v247, 0.0
    %v312 = vmax.f32 %v249, 0.0
    %v313 = vmax.f32 %v253, 0.0
    %v314 = vmax.f32 %v255, 0.0
    %v315 = vmax.f32 %v257, 0.0
    %v316 = vmax.f32 %v259, 0.0
    %v317 = vmax.f32 %v263, 0.0
    %v318 = vmax.f32 %v265, 0.0
    %v319 = vmax.f32 %v267, 0.0
    %v320 = vmax.f32 %v269, 0.0
    %v321 = vmax.f32 %v273, 0.0
    %v322 = vmax.f32 %v275, 0.0
    %v323 = vmax.f32 %v277, 0.0
    %v324 = vmax.f32 %v279, 0.0
    %v325 = vmax.f32 %v283, 0.0
    %v326 = vmax.f32 %v285, 0.0
    %v327 = vmax.f32 %v287, 0.0
    %v328 = vmax.f32 %v289, 0.0
    %v329 = vmax.f32 %v293, 0.0
    %v330 = vmax.f32 %v295, 0.0
    %v331 = vmax.f32 %v297, 0.0
    %v332 = vmax.f32 %v299, 0.0
    %v333 = vld [vmem:[%s4] sm:$0xf]
    %v334 = vld [vmem:[%s4 + $0x4] sm:$0xf]
    %v335 = vld [vmem:[%s5] sm:$0x1]
    %v337 = vlaneseq
    %v338 = vshrl.u32 %v337, 7
    %v339 = vsub.s32 0, %v338
    %v340 = vrot.slane %v335, %v339
    %v344 = vunpack.c.l.b16 %v333
    %v345 = vunpack.c.l.b16 %v334
    %v346 = vpack.c.b16 %v345, %v344
    %vm348 = vcmask 130048
    %v350 = vsel %vm348, %v95, 0
    %v353 = vsel %vm348, %v96, 0
    %v356 = vsel %vm348, %v97, 0
    %v359 = vsel %vm348, %v98, 0
    %v362 = vsel %vm348, %v99, 0
    %v365 = vsel %vm348, %v100, 0
    %v368 = vsel %vm348, %v101, 0
    %v371 = vsel %vm348, %v102, 0
    %373 = vmatprep.subr.bf16.mxu0 0
    %374 = vmatpush1.bf16.msra.mxu0 0
    %375 = vmatprep.subr.bf16.mxu0 0
    %376 = vmatpush1.bf16.msra.mxu0 0
    %377 = vmatprep.subr.bf16.mxu0 0
    %378 = vmatpush1.bf16.msra.mxu0 0
    %379 = vmatprep.subr.bf16.mxu0 0
    %380 = vmatpush1.bf16.msra.mxu0 0
    %381 = vmatprep.subr.bf16.mxu0 0
    %382 = vmatpush1.bf16.msra.mxu0 0
    %383 = vmatprep.subr.bf16.mxu0 0
    %384 = vmatpush1.bf16.msra.mxu0 0
    %385 = vmatprep.subr.bf16.mxu0 0
    %386 = vmatpush1.bf16.msra.mxu0 0
    %387 = vmatprep.subr.bf16.mxu0 0
    %388 = vmatpush1.bf16.msra.mxu0 %v346
    %389 = vmatprep.subr.bf16.mxu0 0
    %390 = vmatpush2.bf16.msra.mxu0 0
    %391 = vmatprep.subr.bf16.mxu0 0
    %392 = vmatpush2.bf16.msra.mxu0 0
    %393 = vmatprep.subr.bf16.mxu0 0
    %394 = vmatpush2.bf16.msra.mxu0 0
    %395 = vmatprep.subr.bf16.mxu0 0
    %396 = vmatpush2.bf16.msra.mxu0 0
    %397 = vmatprep.subr.bf16.mxu0 0
    %398 = vmatpush2.bf16.msra.mxu0 0
    %399 = vmatprep.subr.bf16.mxu0 0
    %400 = vmatpush2.bf16.msra.mxu0 0
    %401 = vmatprep.subr.bf16.mxu0 0
    %402 = vmatpush2.bf16.msra.mxu0 0
    %403 = vmatprep.subr.bf16.mxu0 0
    %404 = vmatpush2.bf16.msra.mxu0 0
    %405 = vmatprep.mubr.bf16.mxu0 0
    %406 = vmatmul.mubr.bf16.gmra.mxu0 %v350
    %v407 = vpop.f32.mrf.mxu0
    %v408 = vadd.f32 %v340, %v407
    %v409 = vpop.f32.mrf.mxu0
    %v410 = vpop.f32.mrf.mxu0
    %v411 = vadd.f32 %v340, %v410
    %v412 = vpop.f32.mrf.mxu0
    %413 = vmatprep.mubr.bf16.mxu0 0
    %414 = vmatmul.mubr.bf16.gmra.mxu0 %v353
    %v415 = vpop.f32.mrf.mxu0
    %v416 = vadd.f32 %v340, %v415
    %v417 = vpop.f32.mrf.mxu0
    %v418 = vpop.f32.mrf.mxu0
    %v419 = vadd.f32 %v340, %v418
    %v420 = vpop.f32.mrf.mxu0
    %421 = vmatprep.mubr.bf16.mxu0 0
    %422 = vmatmul.mubr.bf16.gmra.mxu0 %v356
    %v423 = vpop.f32.mrf.mxu0
    %v424 = vadd.f32 %v340, %v423
    %v425 = vpop.f32.mrf.mxu0
    %v426 = vpop.f32.mrf.mxu0
    %v427 = vadd.f32 %v340, %v426
    %v428 = vpop.f32.mrf.mxu0
    %429 = vmatprep.mubr.bf16.mxu0 0
    %430 = vmatmul.mubr.bf16.gmra.mxu0 %v359
    %v431 = vpop.f32.mrf.mxu0
    %v432 = vadd.f32 %v340, %v431
    %v433 = vpop.f32.mrf.mxu0
    %v434 = vpop.f32.mrf.mxu0
    %v435 = vadd.f32 %v340, %v434
    %v436 = vpop.f32.mrf.mxu0
    %437 = vmatprep.mubr.bf16.mxu0 0
    %438 = vmatmul.mubr.bf16.gmra.mxu0 %v362
    %v439 = vpop.f32.mrf.mxu0
    %v440 = vadd.f32 %v340, %v439
    %v441 = vpop.f32.mrf.mxu0
    %v442 = vpop.f32.mrf.mxu0
    %v443 = vadd.f32 %v340, %v442
    %v444 = vpop.f32.mrf.mxu0
    %445 = vmatprep.mubr.bf16.mxu0 0
    %446 = vmatmul.mubr.bf16.gmra.mxu0 %v365
    %v447 = vpop.f32.mrf.mxu0
    %v448 = vadd.f32 %v340, %v447
    %v449 = vpop.f32.mrf.mxu0
    %v450 = vpop.f32.mrf.mxu0
    %v451 = vadd.f32 %v340, %v450
    %v452 = vpop.f32.mrf.mxu0
    %453 = vmatprep.mubr.bf16.mxu0 0
    %454 = vmatmul.mubr.bf16.gmra.mxu0 %v368
    %v455 = vpop.f32.mrf.mxu0
    %v456 = vadd.f32 %v340, %v455
    %v457 = vpop.f32.mrf.mxu0
    %v458 = vpop.f32.mrf.mxu0
    %v459 = vadd.f32 %v340, %v458
    %v460 = vpop.f32.mrf.mxu0
    %461 = vmatprep.mubr.bf16.mxu0 0
    %462 = vmatmul.mubr.bf16.gmra.mxu0 %v371
    %v463 = vpop.f32.mrf.mxu0
    %v464 = vadd.f32 %v340, %v463
    %v465 = vpop.f32.mrf.mxu0
    %v466 = vpop.f32.mrf.mxu0
    %v467 = vadd.f32 %v340, %v466
    %v468 = vpop.f32.mrf.mxu0
    %469 = vdwg.mxu0
    %v470 = vmax.f32 %v408, 0.0
    %v471 = vmax.f32 %v411, 0.0
    %v472 = vmax.f32 %v416, 0.0
    %v473 = vmax.f32 %v419, 0.0
    %v474 = vmax.f32 %v424, 0.0
    %v475 = vmax.f32 %v427, 0.0
    %v476 = vmax.f32 %v432, 0.0
    %v477 = vmax.f32 %v435, 0.0
    %v478 = vmax.f32 %v440, 0.0
    %v479 = vmax.f32 %v443, 0.0
    %v480 = vmax.f32 %v448, 0.0
    %v481 = vmax.f32 %v451, 0.0
    %v482 = vmax.f32 %v456, 0.0
    %v483 = vmax.f32 %v459, 0.0
    %v484 = vmax.f32 %v464, 0.0
    %v485 = vmax.f32 %v467, 0.0
    %v486 = vpack.c.bf16 %v303, %v301
    %v487 = vpack.c.bf16 %v304, %v302
    %v488 = vpack.c.bf16 %v307, %v305
    %v489 = vpack.c.bf16 %v308, %v306
    %v490 = vpack.c.bf16 %v311, %v309
    %v491 = vpack.c.bf16 %v312, %v310
    %v492 = vpack.c.bf16 %v315, %v313
    %v493 = vpack.c.bf16 %v316, %v314
    %v494 = vpack.c.bf16 %v319, %v317
    %v495 = vpack.c.bf16 %v320, %v318
    %v496 = vpack.c.bf16 %v323, %v321
    %v497 = vpack.c.bf16 %v324, %v322
    %v498 = vpack.c.bf16 %v327, %v325
    %v499 = vpack.c.bf16 %v328, %v326
    %v500 = vpack.c.bf16 %v331, %v329
    %v501 = vpack.c.bf16 %v332, %v330
    %v502 = vld [vmem:[%s6] sm:$0xff]
    %v503 = vld [vmem:[%s6 + $0x8] sm:$0xff]
    %v504 = vld [vmem:[%s6 + $0x10] sm:$0xff]
    %v505 = vld [vmem:[%s6 + $0x18] sm:$0xff]
    %v506 = vld [vmem:[%s6 + $0x20] sm:$0xff]
    %v507 = vld [vmem:[%s6 + $0x28] sm:$0xff]
    %v508 = vld [vmem:[%s6 + $0x30] sm:$0xff]
    %v509 = vld [vmem:[%s6 + $0x38] sm:$0xff]
    %v510 = vld [vmem:[%s6 + $0x40] sm:$0xff]
    %v511 = vld [vmem:[%s6 + $0x48] sm:$0xff]
    %v512 = vld [vmem:[%s6 + $0x50] sm:$0xff]
    %v513 = vld [vmem:[%s6 + $0x58] sm:$0xff]
    %v514 = vld [vmem:[%s6 + $0x60] sm:$0xff]
    %v515 = vld [vmem:[%s6 + $0x68] sm:$0xff]
    %v516 = vld [vmem:[%s6 + $0x70] sm:$0xff]
    %v517 = vld [vmem:[%s6 + $0x78] sm:$0xff]
    %v518 = vld [vmem:[%s6 + $0x80] sm:$0xff]
    %v519 = vld [vmem:[%s6 + $0x88] sm:$0xff]
    %v520 = vld [vmem:[%s6 + $0x90] sm:$0xff]
    %v521 = vld [vmem:[%s6 + $0x98] sm:$0xff]
    %v522 = vld [vmem:[%s6 + $0xa0] sm:$0xff]
    %v523 = vld [vmem:[%s6 + $0xa8] sm:$0xff]
    %v524 = vld [vmem:[%s6 + $0xb0] sm:$0xff]
    %v525 = vld [vmem:[%s6 + $0xb8] sm:$0xff]
    %v526 = vld [vmem:[%s6 + $0xc0] sm:$0xff]
    %v527 = vld [vmem:[%s6 + $0xc8] sm:$0xff]
    %v528 = vld [vmem:[%s6 + $0xd0] sm:$0xff]
    %v529 = vld [vmem:[%s6 + $0xd8] sm:$0xff]
    %v530 = vld [vmem:[%s6 + $0xe0] sm:$0xff]
    %v531 = vld [vmem:[%s6 + $0xe8] sm:$0xff]
    %v532 = vpack.c.bf16 %v471, %v470
    %v533 = vpack.c.bf16 %v473, %v472
    %v534 = vpack.c.bf16 %v475, %v474
    %v535 = vpack.c.bf16 %v477, %v476
    %v536 = vpack.c.bf16 %v479, %v478
    %v537 = vpack.c.bf16 %v481, %v480
    %v538 = vpack.c.bf16 %v483, %v482
    %v539 = vpack.c.bf16 %v485, %v484
    %v540 = vld [vmem:[#allocation3] sm:$0xff]
    %v541 = vld [vmem:[#allocation3 + $0x8] sm:$0xff]
    %v542 = vld [vmem:[#allocation3 + $0x10] sm:$0xff]
    %v543 = vld [vmem:[#allocation3 + $0x18] sm:$0xff]
    %v544 = vld [vmem:[#allocation3 + $0x20] sm:$0xff]
    %v545 = vld [vmem:[#allocation3 + $0x28] sm:$0xff]
    %v546 = vld [vmem:[#allocation3 + $0x30] sm:$0x11]
    %v554 = vunpack.c.l.b16 %v540
    %v555 = vunpack.c.h.b16 %v540
    %v556 = vunpack.c.l.b16 %v541
    %v557 = vunpack.c.h.b16 %v541
    %v558 = vunpack.c.l.b16 %v542
    %v559 = vunpack.c.h.b16 %v542
    %v560 = vunpack.c.l.b16 %v543
    %v561 = vunpack.c.h.b16 %v543
    %v562 = vunpack.c.l.b16 %v544
    %v563 = vunpack.c.h.b16 %v544
    %v564 = vunpack.c.l.b16 %v545
    %v565 = vunpack.c.h.b16 %v545
    %v566 = vunpack.c.l.b16 %v546
    %v567 = vunpack.c.h.b16 %v546
    %v568 = vpack.c.b16 %v556, %v554
    %v569 = vpack.c.b16 %v557, %v555
    %v570 = vpack.c.b16 %v560, %v558
    %v571 = vpack.c.b16 %v561, %v559
    %v572 = vpack.c.b16 %v564, %v562
    %v573 = vpack.c.b16 %v565, %v563
    %v574 = vpack.c.b16 %v566, %v566
    %v575 = vpack.c.b16 %v567, %v567
    %vm582 = vcmask 408576
    %v584 = vsel %vm582, %v532, 0
    %v587 = vsel %vm582, %v533, 0
    %v590 = vsel %vm582, %v534, 0
    %v593 = vsel %vm582, %v535, 0
    %v596 = vsel %vm582, %v536, 0
    %v599 = vsel %vm582, %v537, 0
    %v602 = vsel %vm582, %v538, 0
    %v605 = vsel %vm582, %v539, 0
    %vm607 = vcmask 1040384
    %v609 = vsel %vm607, %v574, 0
    %v612 = vsel %vm607, %v575, 0
    %614 = vmatprep.subr.bf16.mxu0 0
    %615 = vmatpush1.bf16.msra.mxu0 0
    %616 = vmatprep.subr.bf16.mxu0 0
    %617 = vmatpush1.bf16.msra.mxu0 0
    %618 = vmatprep.subr.bf16.mxu0 0
    %619 = vmatpush1.bf16.msra.mxu0 0
    %620 = vmatprep.subr.bf16.mxu0 0
    %621 = vmatpush1.bf16.msra.mxu0 0
    %622 = vmatprep.subr.bf16.mxu0 %v612
    %623 = vmatpush1.bf16.msra.mxu0 %v609
    %624 = vmatprep.subr.bf16.mxu0 %v573
    %625 = vmatpush1.bf16.msra.mxu0 %v572
    %626 = vmatprep.subr.bf16.mxu0 %v571
    %627 = vmatpush1.bf16.msra.mxu0 %v570
    %628 = vmatprep.subr.bf16.mxu0 %v569
    %629 = vmatpush1.bf16.msra.mxu0 %v568
    %630 = vmatprep.subr.bf16.mxu0 0
    %631 = vmatpush2.bf16.msra.mxu0 0
    %632 = vmatprep.subr.bf16.mxu0 0
    %633 = vmatpush2.bf16.msra.mxu0 0
    %634 = vmatprep.subr.bf16.mxu0 0
    %635 = vmatpush2.bf16.msra.mxu0 0
    %636 = vmatprep.subr.bf16.mxu0 0
    %637 = vmatpush2.bf16.msra.mxu0 0
    %638 = vmatprep.subr.bf16.mxu0 0
    %639 = vmatpush2.bf16.msra.mxu0 0
    %640 = vmatprep.subr.bf16.mxu0 0
    %641 = vmatpush2.bf16.msra.mxu0 0
    %642 = vmatprep.subr.bf16.mxu0 0
    %643 = vmatpush2.bf16.msra.mxu0 0
    %644 = vmatprep.subr.bf16.mxu0 0
    %645 = vmatpush2.bf16.msra.mxu0 0
    %646 = vmatprep.mubr.bf16.mxu0 0
    %647 = vmatmul.mubr.bf16.gmra.mxu0 %v584
    %v648 = vpop.f32.mrf.mxu0
    %v649 = vadd.f32 0.0, %v648
    %v650 = vpop.f32.mrf.mxu0
    %v651 = vadd.f32 0.0, %v650
    %v652 = vpop.f32.mrf.mxu0
    %v653 = vadd.f32 0.0, %v652
    %v654 = vpop.f32.mrf.mxu0
    %v655 = vadd.f32 0.0, %v654
    %656 = vmatprep.mubr.bf16.mxu0 0
    %657 = vmatmul.mubr.bf16.gmra.mxu0 %v587
    %v658 = vpop.f32.mrf.mxu0
    %v659 = vadd.f32 0.0, %v658
    %v660 = vpop.f32.mrf.mxu0
    %v661 = vadd.f32 0.0, %v660
    %v662 = vpop.f32.mrf.mxu0
    %v663 = vadd.f32 0.0, %v662
    %v664 = vpop.f32.mrf.mxu0
    %v665 = vadd.f32 0.0, %v664
    %666 = vmatprep.mubr.bf16.mxu0 0
    %667 = vmatmul.mubr.bf16.gmra.mxu0 %v590
    %v668 = vpop.f32.mrf.mxu0
    %v669 = vadd.f32 0.0, %v668
    %v670 = vpop.f32.mrf.mxu0
    %v671 = vadd.f32 0.0, %v670
    %v672 = vpop.f32.mrf.mxu0
    %v673 = vadd.f32 0.0, %v672
    %v674 = vpop.f32.mrf.mxu0
    %v675 = vadd.f32 0.0, %v674
    %676 = vmatprep.mubr.bf16.mxu0 0
    %677 = vmatmul.mubr.bf16.gmra.mxu0 %v593
    %v678 = vpop.f32.mrf.mxu0
    %v679 = vadd.f32 0.0, %v678
    %v680 = vpop.f32.mrf.mxu0
    %v681 = vadd.f32 0.0, %v680
    %v682 = vpop.f32.mrf.mxu0
    %v683 = vadd.f32 0.0, %v682
    %v684 = vpop.f32.mrf.mxu0
    %v685 = vadd.f32 0.0, %v684
    %686 = vmatprep.mubr.bf16.mxu0 0
    %687 = vmatmul.mubr.bf16.gmra.mxu0 %v596
    %v688 = vpop.f32.mrf.mxu0
    %v689 = vadd.f32 0.0, %v688
    %v690 = vpop.f32.mrf.mxu0
    %v691 = vadd.f32 0.0, %v690
    %v692 = vpop.f32.mrf.mxu0
    %v693 = vadd.f32 0.0, %v692
    %v694 = vpop.f32.mrf.mxu0
    %v695 = vadd.f32 0.0, %v694
    %696 = vmatprep.mubr.bf16.mxu0 0
    %697 = vmatmul.mubr.bf16.gmra.mxu0 %v599
    %v698 = vpop.f32.mrf.mxu0
    %v699 = vadd.f32 0.0, %v698
    %v700 = vpop.f32.mrf.mxu0
    %v701 = vadd.f32 0.0, %v700
    %v702 = vpop.f32.mrf.mxu0
    %v703 = vadd.f32 0.0, %v702
    %v704 = vpop.f32.mrf.mxu0
    %v705 = vadd.f32 0.0, %v704
    %706 = vmatprep.mubr.bf16.mxu0 0
    %707 = vmatmul.mubr.bf16.gmra.mxu0 %v602
    %v708 = vpop.f32.mrf.mxu0
    %v709 = vadd.f32 0.0, %v708
    %v710 = vpop.f32.mrf.mxu0
    %v711 = vadd.f32 0.0, %v710
    %v712 = vpop.f32.mrf.mxu0
    %v713 = vadd.f32 0.0, %v712
    %v714 = vpop.f32.mrf.mxu0
    %v715 = vadd.f32 0.0, %v714
    %716 = vmatprep.mubr.bf16.mxu0 0
    %717 = vmatmul.mubr.bf16.gmra.mxu0 %v605
    %v718 = vpop.f32.mrf.mxu0
    %v719 = vadd.f32 0.0, %v718
    %v720 = vpop.f32.mrf.mxu0
    %v721 = vadd.f32 0.0, %v720
    %v722 = vpop.f32.mrf.mxu0
    %v723 = vadd.f32 0.0, %v722
    %v724 = vpop.f32.mrf.mxu0
    %v725 = vadd.f32 0.0, %v724
    %726 = vdwg.mxu0
    %v757 = vunpack.c.l.b16 %v502
    %v758 = vunpack.c.h.b16 %v502
    %v759 = vunpack.c.l.b16 %v503
    %v760 = vunpack.c.h.b16 %v503
    %v761 = vunpack.c.l.b16 %v504
    %v762 = vunpack.c.h.b16 %v504
    %v763 = vunpack.c.l.b16 %v505
    %v764 = vunpack.c.h.b16 %v505
    %v765 = vunpack.c.l.b16 %v506
    %v766 = vunpack.c.h.b16 %v506
    %v767 = vunpack.c.l.b16 %v507
    %v768 = vunpack.c.h.b16 %v507
    %v769 = vunpack.c.l.b16 %v508
    %v770 = vunpack.c.h.b16 %v508
    %v771 = vunpack.c.l.b16 %v509
    %v772 = vunpack.c.h.b16 %v509
    %v773 = vunpack.c.l.b16 %v510
    %v774 = vunpack.c.h.b16 %v510
    %v775 = vunpack.c.l.b16 %v511
    %v776 = vunpack.c.h.b16 %v511
    %v777 = vunpack.c.l.b16 %v512
    %v778 = vunpack.c.h.b16 %v512
    %v779 = vunpack.c.l.b16 %v513
    %v780 = vunpack.c.h.b16 %v513
    %v781 = vunpack.c.l.b16 %v514
    %v782 = vunpack.c.h.b16 %v514
    %v783 = vunpack.c.l.b16 %v515
    %v784 = vunpack.c.h.b16 %v515
    %v785 = vunpack.c.l.b16 %v516
    %v786 = vunpack.c.h.b16 %v516
    %v787 = vunpack.c.l.b16 %v517
    %v788 = vunpack.c.h.b16 %v517
    %v789 = vunpack.c.l.b16 %v518
    %v790 = vunpack.c.h.b16 %v518
    %v791 = vunpack.c.l.b16 %v519
    %v792 = vunpack.c.h.b16 %v519
    %v793 = vunpack.c.l.b16 %v520
    %v794 = vunpack.c.h.b16 %v520
    %v795 = vunpack.c.l.b16 %v521
    %v796 = vunpack.c.h.b16 %v521
    %v797 = vunpack.c.l.b16 %v522
    %v798 = vunpack.c.h.b16 %v522
    %v799 = vunpack.c.l.b16 %v523
    %v800 = vunpack.c.h.b16 %v523
    %v801 = vunpack.c.l.b16 %v524
    %v802 = vunpack.c.h.b16 %v524
    %v803 = vunpack.c.l.b16 %v525
    %v804 = vunpack.c.h.b16 %v525
    %v805 = vunpack.c.l.b16 %v526
    %v806 = vunpack.c.h.b16 %v526
    %v807 = vunpack.c.l.b16 %v527
    %v808 = vunpack.c.h.b16 %v527
    %v809 = vunpack.c.l.b16 %v528
    %v810 = vunpack.c.h.b16 %v528
    %v811 = vunpack.c.l.b16 %v529
    %v812 = vunpack.c.h.b16 %v529
    %v813 = vunpack.c.l.b16 %v530
    %v814 = vunpack.c.h.b16 %v530
    %v815 = vunpack.c.l.b16 %v531
    %v816 = vunpack.c.h.b16 %v531
    %v817 = vpack.c.b16 %v759, %v757
    %v818 = vpack.c.b16 %v760, %v758
    %v819 = vpack.c.b16 %v763, %v761
    %v820 = vpack.c.b16 %v764, %v762
    %v821 = vpack.c.b16 %v767, %v765
    %v822 = vpack.c.b16 %v768, %v766
    %v823 = vpack.c.b16 %v771, %v769
    %v824 = vpack.c.b16 %v772, %v770
    %v825 = vpack.c.b16 %v775, %v773
    %v826 = vpack.c.b16 %v776, %v774
    %v827 = vpack.c.b16 %v779, %v777
    %v828 = vpack.c.b16 %v780, %v778
    %v829 = vpack.c.b16 %v783, %v781
    %v830 = vpack.c.b16 %v784, %v782
    %v831 = vpack.c.b16 %v787, %v785
    %v832 = vpack.c.b16 %v788, %v786
    %v833 = vpack.c.b16 %v791, %v789
    %v834 = vpack.c.b16 %v792, %v790
    %v835 = vpack.c.b16 %v795, %v793
    %v836 = vpack.c.b16 %v796, %v794
    %v837 = vpack.c.b16 %v799, %v797
    %v838 = vpack.c.b16 %v800, %v798
    %v839 = vpack.c.b16 %v803, %v801
    %v840 = vpack.c.b16 %v804, %v802
    %v841 = vpack.c.b16 %v807, %v805
    %v842 = vpack.c.b16 %v808, %v806
    %v843 = vpack.c.b16 %v811, %v809
    %v844 = vpack.c.b16 %v812, %v810
    %v845 = vpack.c.b16 %v815, %v813
    %v846 = vpack.c.b16 %v816, %v814
    %vm877 = vcmask 916480
    %v879 = vsel %vm877, %v487, 0
    %v882 = vsel %vm877, %v489, 0
    %v885 = vsel %vm877, %v491, 0
    %v888 = vsel %vm877, %v493, 0
    %v891 = vsel %vm877, %v495, 0
    %v894 = vsel %vm877, %v497, 0
    %v897 = vsel %vm877, %v499, 0
    %v900 = vsel %vm877, %v501, 0
    %902 = vmatprep.subr.bf16.mxu0 %v832
    %903 = vmatpush1.bf16.msra.mxu0 %v831
    %904 = vmatprep.subr.bf16.mxu0 %v830
    %905 = vmatpush1.bf16.msra.mxu0 %v829
    %906 = vmatprep.subr.bf16.mxu0 %v828
    %907 = vmatpush1.bf16.msra.mxu0 %v827
    %908 = vmatprep.subr.bf16.mxu0 %v826
    %909 = vmatpush1.bf16.msra.mxu0 %v825
    %910 = vmatprep.subr.bf16.mxu0 %v824
    %911 = vmatpush1.bf16.msra.mxu0 %v823
    %912 = vmatprep.subr.bf16.mxu0 %v822
    %913 = vmatpush1.bf16.msra.mxu0 %v821
    %914 = vmatprep.subr.bf16.mxu0 %v820
    %915 = vmatpush1.bf16.msra.mxu0 %v819
    %916 = vmatprep.subr.bf16.mxu0 %v818
    %917 = vmatpush1.bf16.msra.mxu0 %v817
    %918 = vmatprep.subr.bf16.mxu0 0
    %919 = vmatpush2.bf16.msra.mxu0 0
    %920 = vmatprep.subr.bf16.mxu0 %v846
    %921 = vmatpush2.bf16.msra.mxu0 %v845
    %922 = vmatprep.subr.bf16.mxu0 %v844
    %923 = vmatpush2.bf16.msra.mxu0 %v843
    %924 = vmatprep.subr.bf16.mxu0 %v842
    %925 = vmatpush2.bf16.msra.mxu0 %v841
    %926 = vmatprep.subr.bf16.mxu0 %v840
    %927 = vmatpush2.bf16.msra.mxu0 %v839
    %928 = vmatprep.subr.bf16.mxu0 %v838
    %929 = vmatpush2.bf16.msra.mxu0 %v837
    %930 = vmatprep.subr.bf16.mxu0 %v836
    %931 = vmatpush2.bf16.msra.mxu0 %v835
    %932 = vmatprep.subr.bf16.mxu0 %v834
    %933 = vmatpush2.bf16.msra.mxu0 %v833
    %934 = vmatprep.mubr.bf16.mxu0 %v879
    %935 = vmatmul.mubr.bf16.gmra.mxu0 %v486
    %v936 = vpop.f32.mrf.mxu0
    %v937 = vadd.f32 %v649, %v936
    %v938 = vpop.f32.mrf.mxu0
    %v939 = vadd.f32 %v651, %v938
    %v940 = vpop.f32.mrf.mxu0
    %v941 = vadd.f32 %v653, %v940
    %v942 = vpop.f32.mrf.mxu0
    %v943 = vadd.f32 %v655, %v942
    %944 = vmatprep.mubr.bf16.mxu0 %v882
    %945 = vmatmul.mubr.bf16.gmra.mxu0 %v488
    %v946 = vpop.f32.mrf.mxu0
    %v947 = vadd.f32 %v659, %v946
    %v948 = vpop.f32.mrf.mxu0
    %v949 = vadd.f32 %v661, %v948
    %v950 = vpop.f32.mrf.mxu0
    %v951 = vadd.f32 %v663, %v950
    %v952 = vpop.f32.mrf.mxu0
    %v953 = vadd.f32 %v665, %v952
    %954 = vmatprep.mubr.bf16.mxu0 %v885
    %955 = vmatmul.mubr.bf16.gmra.mxu0 %v490
    %v956 = vpop.f32.mrf.mxu0
    %v957 = vadd.f32 %v669, %v956
    %v958 = vpop.f32.mrf.mxu0
    %v959 = vadd.f32 %v671, %v958
    %v960 = vpop.f32.mrf.mxu0
    %v961 = vadd.f32 %v673, %v960
    %v962 = vpop.f32.mrf.mxu0
    %v963 = vadd.f32 %v675, %v962
    %964 = vmatprep.mubr.bf16.mxu0 %v888
    %965 = vmatmul.mubr.bf16.gmra.mxu0 %v492
    %v966 = vpop.f32.mrf.mxu0
    %v967 = vadd.f32 %v679, %v966
    %v968 = vpop.f32.mrf.mxu0
    %v969 = vadd.f32 %v681, %v968
    %v970 = vpop.f32.mrf.mxu0
    %v971 = vadd.f32 %v683, %v970
    %v972 = vpop.f32.mrf.mxu0
    %v973 = vadd.f32 %v685, %v972
    %974 = vmatprep.mubr.bf16.mxu0 %v891
    %975 = vmatmul.mubr.bf16.gmra.mxu0 %v494
    %v976 = vpop.f32.mrf.mxu0
    %v977 = vadd.f32 %v689, %v976
    %v978 = vpop.f32.mrf.mxu0
    %v979 = vadd.f32 %v691, %v978
    %v980 = vpop.f32.mrf.mxu0
    %v981 = vadd.f32 %v693, %v980
    %v982 = vpop.f32.mrf.mxu0
    %v983 = vadd.f32 %v695, %v982
    %984 = vmatprep.mubr.bf16.mxu0 %v894
    %985 = vmatmul.mubr.bf16.gmra.mxu0 %v496
    %v986 = vpop.f32.mrf.mxu0
    %v987 = vadd.f32 %v699, %v986
    %v988 = vpop.f32.mrf.mxu0
    %v989 = vadd.f32 %v701, %v988
    %v990 = vpop.f32.mrf.mxu0
    %v991 = vadd.f32 %v703, %v990
    %v992 = vpop.f32.mrf.mxu0
    %v993 = vadd.f32 %v705, %v992
    %994 = vmatprep.mubr.bf16.mxu0 %v897
    %995 = vmatmul.mubr.bf16.gmra.mxu0 %v498
    %v996 = vpop.f32.mrf.mxu0
    %v997 = vadd.f32 %v709, %v996
    %v998 = vpop.f32.mrf.mxu0
    %v999 = vadd.f32 %v711, %v998
    %v1000 = vpop.f32.mrf.mxu0
    %v1001 = vadd.f32 %v713, %v1000
    %v1002 = vpop.f32.mrf.mxu0
    %v1003 = vadd.f32 %v715, %v1002
    %1004 = vmatprep.mubr.bf16.mxu0 %v900
    %1005 = vmatmul.mubr.bf16.gmra.mxu0 %v500
    %v1006 = vpop.f32.mrf.mxu0
    %v1007 = vadd.f32 %v719, %v1006
    %v1008 = vpop.f32.mrf.mxu0
    %v1009 = vadd.f32 %v721, %v1008
    %v1010 = vpop.f32.mrf.mxu0
    %v1011 = vadd.f32 %v723, %v1010
    %v1012 = vpop.f32.mrf.mxu0
    %v1013 = vadd.f32 %v725, %v1012
    %1014 = vdwg.mxu0
    %v1015 = vld [vmem:[%s8] sm:$0x3]
    %v1017 = vlaneseq
    %v1018 = vshrl.u32 %v1017, 7
    %v1019 = vsub.s32 0, %v1018
    %v1020 = vrot.slane %v1015, %v1019
    %v1021 = vlaneseq
    %v1022 = vshrl.u32 %v1021, 7
    %v1023 = vsub.s32 1, %v1022
    %v1024 = vrot.slane %v1015, %v1023
    %v1027 = vadd.f32 %v937, %v1020
    %v1028 = vadd.f32 %v939, %v1024
    %v1029 = vadd.f32 %v941, %v1020
    %v1030 = vadd.f32 %v943, %v1024
    %v1031 = vadd.f32 %v947, %v1020
    %v1032 = vadd.f32 %v949, %v1024
    %v1033 = vadd.f32 %v951, %v1020
    %v1034 = vadd.f32 %v953, %v1024
    %v1035 = vadd.f32 %v957, %v1020
    %v1036 = vadd.f32 %v959, %v1024
    %v1037 = vadd.f32 %v961, %v1020
    %v1038 = vadd.f32 %v963, %v1024
    %v1039 = vadd.f32 %v967, %v1020
    %v1040 = vadd.f32 %v969, %v1024
    %v1041 = vadd.f32 %v971, %v1020
    %v1042 = vadd.f32 %v973, %v1024
    %v1043 = vadd.f32 %v977, %v1020
    %v1044 = vadd.f32 %v979, %v1024
    %v1045 = vadd.f32 %v981, %v1020
    %v1046 = vadd.f32 %v983, %v1024
    %v1047 = vadd.f32 %v987, %v1020
    %v1048 = vadd.f32 %v989, %v1024
    %v1049 = vadd.f32 %v991, %v1020
    %v1050 = vadd.f32 %v993, %v1024
    %v1051 = vadd.f32 %v997, %v1020
    %v1052 = vadd.f32 %v999, %v1024
    %v1053 = vadd.f32 %v1001, %v1020
    %v1054 = vadd.f32 %v1003, %v1024
    %v1055 = vadd.f32 %v1007, %v1020
    %v1056 = vadd.f32 %v1009, %v1024
    %v1057 = vadd.f32 %v1011, %v1020
    %v1058 = vadd.f32 %v1013, %v1024
    %v1059 = vmax.f32 %v1027, 0.0
    %v1060 = vmax.f32 %v1028, 0.0
    %v1061 = vmax.f32 %v1029, 0.0
    %v1062 = vmax.f32 %v1030, 0.0
    %v1063 = vmax.f32 %v1031, 0.0
    %v1064 = vmax.f32 %v1032, 0.0
    %v1065 = vmax.f32 %v1033, 0.0
    %v1066 = vmax.f32 %v1034, 0.0
    %v1067 = vmax.f32 %v1035, 0.0
    %v1068 = vmax.f32 %v1036, 0.0
    %v1069 = vmax.f32 %v1037, 0.0
    %v1070 = vmax.f32 %v1038, 0.0
    %v1071 = vmax.f32 %v1039, 0.0
    %v1072 = vmax.f32 %v1040, 0.0
    %v1073 = vmax.f32 %v1041, 0.0
    %v1074 = vmax.f32 %v1042, 0.0
    %v1075 = vmax.f32 %v1043, 0.0
    %v1076 = vmax.f32 %v1044, 0.0
    %v1077 = vmax.f32 %v1045, 0.0
    %v1078 = vmax.f32 %v1046, 0.0
    %v1079 = vmax.f32 %v1047, 0.0
    %v1080 = vmax.f32 %v1048, 0.0
    %v1081 = vmax.f32 %v1049, 0.0
    %v1082 = vmax.f32 %v1050, 0.0
    %v1083 = vmax.f32 %v1051, 0.0
    %v1084 = vmax.f32 %v1052, 0.0
    %v1085 = vmax.f32 %v1053, 0.0
    %v1086 = vmax.f32 %v1054, 0.0
    %v1087 = vmax.f32 %v1055, 0.0
    %v1088 = vmax.f32 %v1056, 0.0
    %v1089 = vmax.f32 %v1057, 0.0
    %v1090 = vmax.f32 %v1058, 0.0
    %v1091 = vld [vmem:[%s9] sm:$0x3]
    %s1092 = sld [smem:[#allocation2]]
    %v1093 = vstv %s1092
    %v1095 = vlaneseq
    %v1096 = vshrl.u32 %v1095, 7
    %v1097 = vsub.s32 0, %v1096
    %v1098 = vrot.slane %v1091, %v1097
    %v1099 = vlaneseq
    %v1100 = vshrl.u32 %v1099, 7
    %v1101 = vsub.s32 1, %v1100
    %v1102 = vrot.slane %v1091, %v1101
    %v1104 = vsel %vm877, %v1102, 0
    %v1107 = vsel %vm877, %v1060, 0
    %v1110 = vsel %vm877, %v1062, 0
    %v1113 = vsel %vm877, %v1064, 0
    %v1116 = vsel %vm877, %v1066, 0
    %v1119 = vsel %vm877, %v1068, 0
    %v1122 = vsel %vm877, %v1070, 0
    %v1125 = vsel %vm877, %v1072, 0
    %v1128 = vsel %vm877, %v1074, 0
    %v1131 = vsel %vm877, %v1076, 0
    %v1134 = vsel %vm877, %v1078, 0
    %v1137 = vsel %vm877, %v1080, 0
    %v1140 = vsel %vm877, %v1082, 0
    %v1143 = vsel %vm877, %v1084, 0
    %v1146 = vsel %vm877, %v1086, 0
    %v1149 = vsel %vm877, %v1088, 0
    %v1152 = vsel %vm877, %v1090, 0
    %1154 = vmatprep.subr.mxu0 %v1152
    %1155 = vmatpush1.xpose.msra.mxu0 %v1089
    %1156 = vmatprep.subr.mxu0 %v1149
    %1157 = vmatpush1.xpose.msra.mxu0 %v1087
    %1158 = vmatprep.subr.mxu0 %v1146
    %1159 = vmatpush1.xpose.msra.mxu0 %v1085
    %1160 = vmatprep.subr.mxu0 %v1143
    %1161 = vmatpush1.xpose.msra.mxu0 %v1083
    %1162 = vmatprep.subr.mxu0 %v1140
    %1163 = vmatpush1.xpose.msra.mxu0 %v1081
    %1164 = vmatprep.subr.mxu0 %v1137
    %1165 = vmatpush1.xpose.msra.mxu0 %v1079
    %1166 = vmatprep.subr.mxu0 %v1134
    %1167 = vmatpush1.xpose.msra.mxu0 %v1077
    %1168 = vmatprep.subr.mxu0 %v1131
    %1169 = vmatpush1.xpose.msra.mxu0 %v1075
    %1170 = vmatprep.subr.mxu0 %v1128
    %1171 = vmatpush1.xpose.msra.mxu0 %v1073
    %1172 = vmatprep.subr.mxu0 %v1125
    %1173 = vmatpush1.xpose.msra.mxu0 %v1071
    %1174 = vmatprep.subr.mxu0 %v1122
    %1175 = vmatpush1.xpose.msra.mxu0 %v1069
    %1176 = vmatprep.subr.mxu0 %v1119
    %1177 = vmatpush1.xpose.msra.mxu0 %v1067
    %1178 = vmatprep.subr.mxu0 %v1116
    %1179 = vmatpush1.xpose.msra.mxu0 %v1065
    %1180 = vmatprep.subr.mxu0 %v1113
    %1181 = vmatpush1.xpose.msra.mxu0 %v1063
    %1182 = vmatprep.subr.mxu0 %v1110
    %1183 = vmatpush1.xpose.msra.mxu0 %v1061
    %1184 = vmatprep.subr.mxu0 %v1107
    %1185 = vmatpush1.xpose.msra.mxu0 %v1059
    %1186 = vmatprep.subr.mxu0 0.0
    %1187 = vmatpush2.xpose.msra.mxu0 0.0
    %1188 = vmatprep.subr.mxu0 0.0
    %1189 = vmatpush2.xpose.msra.mxu0 0.0
    %1190 = vmatprep.subr.mxu0 0.0
    %1191 = vmatpush2.xpose.msra.mxu0 0.0
    %1192 = vmatprep.subr.mxu0 0.0
    %1193 = vmatpush2.xpose.msra.mxu0 0.0
    %1194 = vmatprep.subr.mxu0 0.0
    %1195 = vmatpush2.xpose.msra.mxu0 0.0
    %1196 = vmatprep.subr.mxu0 0.0
    %1197 = vmatpush2.xpose.msra.mxu0 0.0
    %1198 = vmatprep.subr.mxu0 0.0
    %1199 = vmatpush2.xpose.msra.mxu0 0.0
    %1200 = vmatprep.subr.mxu0 0.0
    %1201 = vmatpush2.xpose.msra.mxu0 0.0
    %1202 = vmatprep.subr.mxu0 0.0
    %1203 = vmatpush2.xpose.msra.mxu0 0.0
    %1204 = vmatprep.subr.mxu0 0.0
    %1205 = vmatpush2.xpose.msra.mxu0 0.0
    %1206 = vmatprep.subr.mxu0 0.0
    %1207 = vmatpush2.xpose.msra.mxu0 0.0
    %1208 = vmatprep.subr.mxu0 0.0
    %1209 = vmatpush2.xpose.msra.mxu0 0.0
    %1210 = vmatprep.subr.mxu0 0.0
    %1211 = vmatpush2.xpose.msra.mxu0 0.0
    %1212 = vmatprep.subr.mxu0 0.0
    %1213 = vmatpush2.xpose.msra.mxu0 0.0
    %1214 = vmatprep.subr.mxu0 0.0
    %1215 = vmatpush2.xpose.msra.mxu0 0.0
    %1216 = vmatprep.subr.mxu0 0.0
    %1217 = vmatpush2.xpose.msra.mxu0 0.0
    %1218 = vmatprep.mubr.f32.mxu0 %v1104
    %1219 = vmatmul.mubr.f32.gmra.mxu0 %v1098
    %v1220 = vpop.f32.mrf.mxu0
    %v1221 = vadd.f32 %v1093, %v1220
    %v1222 = vpop.f32.mrf.mxu0
    %1223 = vdwg.mxu0
    %v1224 = vxor.u32 %v1221, 2147483648
    %v1225 = vmul.f32 %v1224, 1.442695
    %v1226 = vpow.pop %v1225
    %v1227 = vadd.f32 %v1226, 1.0
    %v1228 = vrcp.pop %v1227
    %v1229 = vmul.f32 1.0, %v1228
    %1230 = vst [vmem:[#allocation6] sm:$0x1] %v1229
    // Predicated region
    $region50: #{tpu_custom_call.1} parent=1 // pred_check
      _
    $region51: #{tpu_custom_call.1} parent=1 // pred_check_branch
      %1232 = sbr.rel (0) target = $region53
    $region52: #{tpu_custom_call.1} parent=1 // pred_region
      %s1234 = ssub.s32 16, 16
      %1235 = vsyncadd [#allocation5], %s1234
      %s1237 = sshll.u32 [#allocation6], 4
      %s1238 = int_to_ptr.vmem [resolvable:$true] %s1237
      %1240 = dma.vmem_to_hbm [thread:$0]  %s1238, 16, %s11, [#allocation5]
    $region53: #{tpu_custom_call.1} parent=1 // pred_fallthru
      _
    // Predicated region
    $region54: #{tpu_custom_call.1} parent=1 // pred_check
      _
    $region55: #{tpu_custom_call.1} parent=1 // pred_check_branch
      %1242 = sbr.rel (0) target = $region57
    $region56: #{tpu_custom_call.1} parent=1 // pred_region
      %1243 = dma.done [#allocation5], 16
    $region57: #{tpu_custom_call.1} parent=1 // pred_fallthru
      _
    %1244 = vsyncpa [#allocation4], 1
    %1245 = vsyncpa [#allocation5], 1

</llo_original>
